<compile_context>
chip_gen: v5e
topology: v5e:2x2
jax: 0.10.0
libtpu: 0.0.40
codegen_flags: <defaults>
</compile_context>

<pallas_src>
import functools

import jax
import jax.numpy as jnp
from jax.experimental import pallas as pl
from jax.experimental.pallas import tpu as pltpu


def _channel_attention_kernel(x_ref, w1t_ref, b1_ref, w2t_ref, b2_ref, o_ref,
                              *, inv_hw):
    # x block: (nb, C, HW). w1t: (C, Cr), b1: (1, Cr), w2t: (Cr, C), b2: (1, C)
    x = x_ref[...]                                               # (nb, C, HW)
    # AdaptiveAvgPool2d(1): f32 accumulation regardless of input dtype.
    avg = jnp.sum(x.astype(jnp.float32), axis=-1) * inv_hw       # (nb, C)
    # 1x1 convs == batched channel matmuls (tiny vs. the HBM-bound scale pass).
    h = jnp.dot(avg, w1t_ref[...],
                preferred_element_type=jnp.float32) + b1_ref[...]   # (nb, Cr)
    h = jnp.where(h >= 0, h, 0.2 * h)                            # LeakyReLU(0.2)
    s = jnp.dot(h, w2t_ref[...],
                preferred_element_type=jnp.float32) + b2_ref[...]   # (nb, C)
    score = jax.nn.sigmoid(s).astype(x.dtype)                    # (nb, C)
    # Block-wide scale; score broadcast over the HW lanes.
    o_ref[...] = (x * score[:, :, None]).astype(o_ref.dtype)


def _tpu_topology():
    """Best-effort (tensorcores_per_chip, per_core_vmem_bytes)."""
    vmem_cap = None
    try:
        vmem_cap = int(pltpu.get_tpu_info().vmem_capacity_bytes)
    except Exception:
        pass
    kind = ""
    try:
        kind = jax.devices()[0].device_kind.lower()
    except Exception:
        pass
    tc_per_chip = 2 if "v7" in kind else 1
    if vmem_cap is None:
        vmem_cap = (64 << 20) if tc_per_chip == 2 else (128 << 20)
    return tc_per_chip, vmem_cap


def channel_attention(x_nchw, w1, b1, w2, b2, *, block_bytes_budget=None):
    """x_nchw: (N, C, H, W).  w1: (C/r, C), b1: (C/r, 1), w2: (C, C/r), b2: (C, 1)."""
    N, C, H, W = x_nchw.shape
    Cr = w1.shape[0]
    HW = H * W
    dtype = x_nchw.dtype
    itemsize = jnp.dtype(dtype).itemsize

    # No HW padding / no output slice: block last two dims equal the full
    # array dims (the "equals full dim" exception to the (8,128) rule).
    x = x_nchw.reshape(N, C, HW)

    # Pre-transpose the 1x1-conv weights once so the kernel does batched
    # (nb, C) @ (C, Cr) and (nb, Cr) @ (Cr, C) matmuls; biases as row vectors.
    w1t = jnp.transpose(w1)               # (C, Cr)
    w2t = jnp.transpose(w2)               # (Cr, C)
    b1r = jnp.reshape(b1, (1, Cr))
    b2r = jnp.reshape(b2, (1, C))
    weight_bytes = int(
        (w1t.size + b1r.size) * jnp.dtype(w1.dtype).itemsize
        + (w2t.size + b2r.size) * jnp.dtype(w2.dtype).itemsize)

    tc_per_chip, vmem_cap = _tpu_topology()
    per_sample = C * HW * itemsize

    # Generation-aware block sizing: ~12 MiB blocks on 64 MiB-VMEM chips (v7x),
    # ~20 MiB on 128 MiB-VMEM chips (v5e/v6e); always fit double-buffered
    # in+out blocks + weights + slack in physical VMEM.
    if block_bytes_budget is None:
        target_block = (12 << 20) if vmem_cap <= (64 << 20) else (20 << 20)
        usable = vmem_cap - (8 << 20) - 2 * weight_bytes
        block_bytes_budget = max(per_sample, min(target_block, usable // 5))

    nb = int(max(1, min(block_bytes_budget // per_sample, N)))

    # Give every TensorCore a grid step on multi-TC chips (v7x); best-effort
    # make the parallel grid extent a multiple of the TC count.  On 1-TC chips
    # (v5e/v6e) this is a no-op, so small N keeps one big block.
    if tc_per_chip > 1 and N >= tc_per_chip:
        nb = min(nb, pl.cdiv(N, tc_per_chip))
        steps = pl.cdiv(N, nb)
        while steps > 1 and steps % tc_per_chip != 0 and nb > 1:
            nb -= 1
            steps = pl.cdiv(N, nb)

    grid = (pl.cdiv(N, nb),)   # ragged batch tail handled by Pallas block clamping

    block_bytes = nb * per_sample
    vmem_limit = int(min(
        max(4 * block_bytes + 2 * weight_bytes + (8 << 20), 16 << 20),
        vmem_cap - (2 << 20)))

    cost = pl.CostEstimate(
        flops=int(N * (2 * C * HW + 4 * C * Cr)),
        transcendentals=int(N * C),
        bytes_accessed=int(2 * N * C * HW * itemsize + 2 * weight_bytes),
    )

    kernel = functools.partial(_channel_attention_kernel, inv_hw=1.0 / HW)

    # NOTE: if the caller can donate x, input_output_aliases={0: 0} halves the
    # peak HBM footprint (shapes match since there is no padding); not used
    # here because the self-test re-reads x for the reference.
    out = pl.pallas_call(
        kernel,
        out_shape=jax.ShapeDtypeStruct((N, C, HW), dtype),
        grid_spec=pltpu.PrefetchScalarGridSpec(
            num_scalar_prefetch=0,
            grid=grid,
            in_specs=[
                pl.BlockSpec((nb, C, HW), lambda n: (n, 0, 0)),
                # Weights/biases: constant index_map (fetched once; tiny at
                # these sizes — for very large C, hoist into VMEM scratch to
                # reclaim the second pipeline buffer for the x block).
                pl.BlockSpec((C, Cr), lambda n: (0, 0)),
                pl.BlockSpec((1, Cr), lambda n: (0, 0)),
                pl.BlockSpec((Cr, C), lambda n: (0, 0)),
                pl.BlockSpec((1, C), lambda n: (0, 0)),
            ],
            out_specs=pl.BlockSpec((nb, C, HW), lambda n: (n, 0, 0)),
        ),
        compiler_params=pltpu.CompilerParams(
            dimension_semantics=("parallel",),
            vmem_limit_bytes=vmem_limit,
        ),
        cost_estimate=cost,
    )(x, w1t, b1r, w2t, b2r)

    # TODO(synk): for feature maps where a single (C, HW) slab exceeds VMEM
    # even at nb=1, switch to a two-pass structure (HW-tiled mean reduction,
    # then a pure lane-dense scale pass).  Not needed at these shapes.
    return out.reshape(N, C, H, W)


def reference(x, w1, b1, w2, b2):
    # Pure-JAX reference of the PyTorch forward pass.
    avg = jnp.mean(x, axis=(2, 3), keepdims=False)           # (N, C)
    h = jnp.einsum("oc,nc->no", w1, avg) + b1[:, 0]           # (N, C/r)
    h = jnp.where(h >= 0, h, 0.2 * h)
    s = jnp.einsum("oc,nc->no", w2, h) + b2[:, 0]             # (N, C)
    score = jax.nn.sigmoid(s)[:, :, None, None]
    return x * score


if __name__ == "__main__":
    # Small shapes consistent with the module: channels=32, reduction=8.
    N, C, H, W = 2, 32, 16, 16
    reduction = 8
    Cr = C // reduction

    key = jax.random.PRNGKey(0)
    kx, k1, k2, k3, k4, kx2 = jax.random.split(key, 6)

    x = jax.random.normal(kx, (N, C, H, W), dtype=jnp.float32)
    # Deterministic synthetic parameters (Conv2d 1x1 weights == dense matrices).
    w1 = jax.random.normal(k1, (Cr, C), dtype=jnp.float32) * (1.0 / jnp.sqrt(C))
    b1 = jax.random.normal(k2, (Cr, 1), dtype=jnp.float32) * 0.1
    w2 = jax.random.normal(k3, (C, Cr), dtype=jnp.float32) * (1.0 / jnp.sqrt(Cr))
    b2 = jax.random.normal(k4, (C, 1), dtype=jnp.float32) * 0.1

    out = jax.block_until_ready(channel_attention(x, w1, b1, w2, b2))
    ref = reference(x, w1, b1, w2, b2)
    assert out.shape == (N, C, H, W)
    assert jnp.allclose(out, ref, atol=1e-5, rtol=1e-5), "mismatch vs reference"

    # Exercise the previously untested paths: HW not a multiple of 128
    # (masked tail stores, no pad) and a ragged batch grid (N % nb != 0),
    # by forcing a 2-sample block budget with N=3.
    N2, H2, W2 = 3, 15, 15
    x2 = jax.random.normal(kx2, (N2, C, H2, W2), dtype=jnp.float32)
    out2 = jax.block_until_ready(
        channel_attention(x2, w1, b1, w2, b2,
                          block_bytes_budget=2 * C * H2 * W2 * 4))
    ref2 = reference(x2, w1, b1, w2, b2)
    assert out2.shape == (N2, C, H2, W2)
    assert jnp.allclose(out2, ref2, atol=1e-5, rtol=1e-5), "ragged-case mismatch"

    print("KERNEL_OK")
</pallas_src>

<mosaic_0001>
module attributes {stable_mosaic.version = 11 : i64} {
  func.func @_channel_attention_kernel(%arg0: i32, %arg1: memref<2x32x256xf32, #tpu.memory_space<vmem>>, %arg2: memref<32x4xf32, #tpu.memory_space<vmem>>, %arg3: memref<1x4xf32, #tpu.memory_space<vmem>>, %arg4: memref<4x32xf32, #tpu.memory_space<vmem>>, %arg5: memref<1x32xf32, #tpu.memory_space<vmem>>, %arg6: memref<2x32x256xf32, #tpu.memory_space<vmem>>) attributes {dimension_semantics = [#tpu.dimension_semantics<parallel>], iteration_bounds = array<i64: 1>, scalar_prefetch = 0 : i64, scratch_operands = 0 : i64, tpu.core_type = #tpu.core_type<tc>, window_params = [{transform_indices = @transform_0, window_bounds = array<i64: 2, 32, 256>}, {pipeline_mode = #tpu.pipeline_mode<synchronous>, transform_indices = @transform_1, window_bounds = array<i64: 32, 4>}, {pipeline_mode = #tpu.pipeline_mode<synchronous>, transform_indices = @transform_2, window_bounds = array<i64: 1, 4>}, {pipeline_mode = #tpu.pipeline_mode<synchronous>, transform_indices = @transform_3, window_bounds = array<i64: 4, 32>}, {pipeline_mode = #tpu.pipeline_mode<synchronous>, transform_indices = @transform_4, window_bounds = array<i64: 1, 32>}, {transform_indices = @transform_5, window_bounds = array<i64: 2, 32, 256>}]} {
    %c0 = arith.constant 0 : index
    %c0_0 = arith.constant 0 : index
    %c0_1 = arith.constant 0 : index
    %0 = vector.load %arg1[%c0, %c0_0, %c0_1] : memref<2x32x256xf32, #tpu.memory_space<vmem>>, vector<2x32x256xf32>
    %cst = arith.constant dense<0.000000e+00> : vector<2x32xf32>
    %1 = vector.multi_reduction <add>, %0, %cst [2] : vector<2x32x256xf32> to vector<2x32xf32>
    %cst_2 = arith.constant 3.906250e-03 : f32
    %2 = vector.broadcast %cst_2 : f32 to vector<2x32xf32>
    %3 = arith.mulf %1, %2 : vector<2x32xf32>
    %c0_3 = arith.constant 0 : index
    %c0_4 = arith.constant 0 : index
    %4 = vector.load %arg2[%c0_3, %c0_4] : memref<32x4xf32, #tpu.memory_space<vmem>>, vector<32x4xf32>
    %cst_5 = arith.constant dense<0.000000e+00> : vector<2x4xf32>
    %5 = tpu.matmul %3, %4, %cst_5 {dimension_numbers = #tpu.dot_dimension_numbers<[1], [0], [0], [1], [0, 0, 1, 1], [], []>} : vector<2x32xf32>, vector<32x4xf32>, vector<2x4xf32> -> vector<2x4xf32>
    %c0_6 = arith.constant 0 : index
    %c0_7 = arith.constant 0 : index
    %6 = vector.load %arg3[%c0_6, %c0_7] : memref<1x4xf32, #tpu.memory_space<vmem>>, vector<1x4xf32>
    %7 = vector.broadcast %6 : vector<1x4xf32> to vector<2x4xf32>
    %8 = arith.addf %5, %7 : vector<2x4xf32>
    %cst_8 = arith.constant 0.000000e+00 : f32
    %9 = vector.broadcast %cst_8 : f32 to vector<2x4xf32>
    %10 = arith.cmpf oge, %8, %9 : vector<2x4xf32>
    %cst_9 = arith.constant 2.000000e-01 : f32
    %11 = vector.broadcast %cst_9 : f32 to vector<2x4xf32>
    %12 = arith.mulf %11, %8 : vector<2x4xf32>
    %13 = arith.select %10, %8, %12 : vector<2x4xi1>, vector<2x4xf32>
    %c0_10 = arith.constant 0 : index
    %c0_11 = arith.constant 0 : index
    %14 = vector.load %arg4[%c0_10, %c0_11] : memref<4x32xf32, #tpu.memory_space<vmem>>, vector<4x32xf32>
    %cst_12 = arith.constant dense<0.000000e+00> : vector<2x32xf32>
    %15 = tpu.matmul %13, %14, %cst_12 {dimension_numbers = #tpu.dot_dimension_numbers<[1], [0], [0], [1], [0, 0, 1, 1], [], []>} : vector<2x4xf32>, vector<4x32xf32>, vector<2x32xf32> -> vector<2x32xf32>
    %c0_13 = arith.constant 0 : index
    %c0_14 = arith.constant 0 : index
    %16 = vector.load %arg5[%c0_13, %c0_14] : memref<1x32xf32, #tpu.memory_space<vmem>>, vector<1x32xf32>
    %17 = vector.broadcast %16 : vector<1x32xf32> to vector<2x32xf32>
    %18 = arith.addf %15, %17 : vector<2x32xf32>
    %19 = arith.negf %18 : vector<2x32xf32>
    %20 = math.exp %19 : vector<2x32xf32>
    %cst_15 = arith.constant 1.000000e+00 : f32
    %21 = vector.broadcast %cst_15 : f32 to vector<2x32xf32>
    %22 = arith.addf %21, %20 : vector<2x32xf32>
    %23 = arith.divf %21, %22 : vector<2x32xf32>
    %24 = vector.shape_cast %23 : vector<2x32xf32> to vector<2x32x1xf32>
    %25 = vector.broadcast %24 : vector<2x32x1xf32> to vector<2x32x256xf32>
    %26 = arith.mulf %0, %25 : vector<2x32x256xf32>
    %c0_16 = arith.constant 0 : index
    %c0_17 = arith.constant 0 : index
    %c0_18 = arith.constant 0 : index
    %27 = vector.load %arg6[%c0_16, %c0_17, %c0_18] : memref<2x32x256xf32, #tpu.memory_space<vmem>>, vector<2x32x256xf32>
    tpu.vector_store %arg6[%c0_16, %c0_17, %c0_18], %26 {strides = array<i32>} : memref<2x32x256xf32, #tpu.memory_space<vmem>>, vector<2x32x256xf32>,
    return
  }
  func.func @transform_0(%arg0: i32) -> (i32, i32, i32) {
    %c0_i32 = arith.constant 0 : i32
    %c0_i32_0 = arith.constant 0 : i32
    %c0_i32_1 = arith.constant 0 : i32
    return %arg0, %c0_i32, %c0_i32_0 : i32, i32, i32
  }
  func.func @transform_1(%arg0: i32) -> (i32, i32) {
    %c0_i32 = arith.constant 0 : i32
    %c0_i32_0 = arith.constant 0 : i32
    %c0_i32_1 = arith.constant 0 : i32
    return %c0_i32, %c0_i32_0 : i32, i32
  }
  func.func @transform_2(%arg0: i32) -> (i32, i32) {
    %c0_i32 = arith.constant 0 : i32
    %c0_i32_0 = arith.constant 0 : i32
    %c0_i32_1 = arith.constant 0 : i32
    return %c0_i32, %c0_i32_0 : i32, i32
  }
  func.func @transform_3(%arg0: i32) -> (i32, i32) {
    %c0_i32 = arith.constant 0 : i32
    %c0_i32_0 = arith.constant 0 : i32
    %c0_i32_1 = arith.constant 0 : i32
    return %c0_i32, %c0_i32_0 : i32, i32
  }
  func.func @transform_4(%arg0: i32) -> (i32, i32) {
    %c0_i32 = arith.constant 0 : i32
    %c0_i32_0 = arith.constant 0 : i32
    %c0_i32_1 = arith.constant 0 : i32
    return %c0_i32, %c0_i32_0 : i32, i32
  }
  func.func @transform_5(%arg0: i32) -> (i32, i32, i32) {
    %c0_i32 = arith.constant 0 : i32
    %c0_i32_0 = arith.constant 0 : i32
    %c0_i32_1 = arith.constant 0 : i32
    return %arg0, %c0_i32, %c0_i32_0 : i32, i32, i32
  }
}

</mosaic_0001>

<llo_original>
// kernel: tpu_custom_call.1
$region0: #{tpu_custom_call.1}
  #allocation0 [shape = 'u32[]', space=smem, size = 0x4, offset = 0x4, fixed_abs, tag = 'smem constant byte address 0x4 - core index']
  #allocation1 [shape = 'u32[72,128]{1,0:T(1,128)}', space=vmem, size = 0x9000, scoped, tag = 'internal scratch']
  %s0 = inlined_call_operand.hbm [shape: f32[2,32,256], index: 0, kind: input, shape index: {}]
  %s1 = inlined_call_operand.vmem [shape: f32[32,4], index: 1, kind: input, shape index: {}]
  %s2 = inlined_call_operand.vmem [shape: f32[1,4], index: 2, kind: input, shape index: {}]
  %s3 = inlined_call_operand.vmem [shape: f32[4,32], index: 3, kind: input, shape index: {}]
  %s4 = inlined_call_operand.vmem [shape: f32[1,32], index: 4, kind: input, shape index: {}]
  %s5 = inlined_call_operand.hbm [shape: f32[2,32,256], index: 5, kind: output, shape index: {}]
  %s6 = sld [smem:[#allocation0]]
  $region34: #{tpu_custom_call.1} parent=0
    _
  %s8 = ssub.s32 1, %s6
  %s9 = scalar_select 0, %s8, %s6
  $region1: #{tpu_custom_call.1} parent=0
    #allocation2 [shape = 'u8[65536]{0}', space=vmem, size = 0x10000, scoped, tag = 'input window, operand 0, single buffered']
    #allocation3 [shape = 's32[1]{0}', space=sflag, size = 0x4, scoped, tag = 'scoped memory for tpu_custom_call.1']
    #allocation4 [shape = 's32[1]{0}', space=sflag, size = 0x4, scoped, tag = 'scoped memory for tpu_custom_call.1']
    #allocation5 [shape = 'u8[65536]{0}', space=vmem, size = 0x10000, scoped, tag = 'output window, operand 0, single buffered']
    %10 = vsyncpa [#allocation3], 0
    %11 = vsyncpa [#allocation4], 0
    // Predicated region
    $region2: #{tpu_custom_call.1} parent=1 // pred_check
      _
    $region3: #{tpu_custom_call.1} parent=1 // pred_check_branch
      %13 = sbr.rel (0) target = $region5
    $region4: #{tpu_custom_call.1} parent=1 // pred_region
      %15 = vsyncadd [#allocation3], 0
      %s16 = sshll.u32 %s0, 4
      %s17 = int_to_ptr.hbm [resolvable:$true] %s16
      %s18 = sshll.u32 [#allocation2], 4
      %s19 = int_to_ptr.vmem [resolvable:$true] %s18
      %24 = dma.hbm_to_vmem [thread:$0]  %s17, 2048, %s19, [#allocation3], 256, 256, 16
    $region5: #{tpu_custom_call.1} parent=1 // pred_fallthru
      _
    // Predicated region
    $region6: #{tpu_custom_call.1} parent=1 // pred_check
      _
    $region7: #{tpu_custom_call.1} parent=1 // pred_check_branch
      %26 = sbr.rel (0) target = $region9
    $region8: #{tpu_custom_call.1} parent=1 // pred_region
      _
    $region9: #{tpu_custom_call.1} parent=1 // pred_fallthru
      _
    // Predicated region
    $region10: #{tpu_custom_call.1} parent=1 // pred_check
      _
    $region11: #{tpu_custom_call.1} parent=1 // pred_check_branch
      %28 = sbr.rel (0) target = $region13
    $region12: #{tpu_custom_call.1} parent=1 // pred_region
      _
    $region13: #{tpu_custom_call.1} parent=1 // pred_fallthru
      _
    // Predicated region
    $region14: #{tpu_custom_call.1} parent=1 // pred_check
      _
    $region15: #{tpu_custom_call.1} parent=1 // pred_check_branch
      %30 = sbr.rel (0) target = $region17
    $region16: #{tpu_custom_call.1} parent=1 // pred_region
      _
    $region17: #{tpu_custom_call.1} parent=1 // pred_fallthru
      _
    // Predicated region
    $region18: #{tpu_custom_call.1} parent=1 // pred_check
      _
    $region19: #{tpu_custom_call.1} parent=1 // pred_check_branch
      %32 = sbr.rel (0) target = $region21
    $region20: #{tpu_custom_call.1} parent=1 // pred_region
      _
    $region21: #{tpu_custom_call.1} parent=1 // pred_fallthru
      _
    // Predicated region
    $region22: #{tpu_custom_call.1} parent=1 // pred_check
      _
    $region23: #{tpu_custom_call.1} parent=1 // pred_check_branch
      %34 = sbr.rel (0) target = $region25
    $region24: #{tpu_custom_call.1} parent=1 // pred_region
      %36 = dma.done [#allocation3], 2048
    $region25: #{tpu_custom_call.1} parent=1 // pred_fallthru
      _
    %v37 = vld [vmem:[#allocation2] sm:$0xff]
    %v38 = vld [vmem:[#allocation2 + $0x8] sm:$0xff]
    %v39 = vld [vmem:[#allocation2 + $0x10] sm:$0xff]
    %v40 = vld [vmem:[#allocation2 + $0x18] sm:$0xff]
    %v41 = vld [vmem:[#allocation2 + $0x20] sm:$0xff]
    %v42 = vld [vmem:[#allocation2 + $0x28] sm:$0xff]
    %v43 = vld [vmem:[#allocation2 + $0x30] sm:$0xff]
    %v44 = vld [vmem:[#allocation2 + $0x38] sm:$0xff]
    %v45 = vld [vmem:[#allocation2 + $0x40] sm:$0xff]
    %v46 = vld [vmem:[#allocation2 + $0x48] sm:$0xff]
    %v47 = vld [vmem:[#allocation2 + $0x50] sm:$0xff]
    %v48 = vld [vmem:[#allocation2 + $0x58] sm:$0xff]
    %v49 = vld [vmem:[#allocation2 + $0x60] sm:$0xff]
    %v50 = vld [vmem:[#allocation2 + $0x68] sm:$0xff]
    %v51 = vld [vmem:[#allocation2 + $0x70] sm:$0xff]
    %v52 = vld [vmem:[#allocation2 + $0x78] sm:$0xff]
    %v53 = vadd.f32 %v37, %v38
    %54 = vadd.xlane.f32.xlu0 %v53
    %v55 = vpop.xlane.xlu0 %54
    %v56 = vadd.f32 %v39, %v40
    %57 = vadd.xlane.f32.xlu0 %v56
    %v58 = vpop.xlane.xlu0 %57
    %v59 = vadd.f32 %v41, %v42
    %60 = vadd.xlane.f32.xlu0 %v59
    %v61 = vpop.xlane.xlu0 %60
    %v62 = vadd.f32 %v43, %v44
    %63 = vadd.xlane.f32.xlu0 %v62
    %v64 = vpop.xlane.xlu0 %63
    %v65 = vadd.f32 %v45, %v46
    %66 = vadd.xlane.f32.xlu0 %v65
    %v67 = vpop.xlane.xlu0 %66
    %v68 = vadd.f32 %v47, %v48
    %69 = vadd.xlane.f32.xlu0 %v68
    %v70 = vpop.xlane.xlu0 %69
    %v71 = vadd.f32 %v49, %v50
    %72 = vadd.xlane.f32.xlu0 %v71
    %v73 = vpop.xlane.xlu0 %72
    %v74 = vadd.f32 %v51, %v52
    %75 = vadd.xlane.f32.xlu0 %v74
    %v76 = vpop.xlane.xlu0 %75
    %v77 = vmul.f32 %v55, 0.00390625
    %v78 = vmul.f32 %v58, 0.00390625
    %v79 = vmul.f32 %v61, 0.00390625
    %v80 = vmul.f32 %v64, 0.00390625
    %v81 = vmul.f32 %v67, 0.00390625
    %v82 = vmul.f32 %v70, 0.00390625
    %v83 = vmul.f32 %v73, 0.00390625
    %v84 = vmul.f32 %v76, 0.00390625
    %v85 = vld [vmem:[%s1] sm:$0xff]
    %v86 = vld [vmem:[%s1 + $0x8] sm:$0xff]
    %v87 = vld [vmem:[%s1 + $0x10] sm:$0xff]
    %v88 = vld [vmem:[%s1 + $0x18] sm:$0xff]
    %v89 = vld [vmem:[%s2] sm:$0x1]
    %v91 = vperm.slane %v89, 0
    %v101 = vlaneseq
    %v102 = vand.u32 %v101, 127
    %v103 = vperm.slane %v77, %v102
    %v104 = vadd.s32 %v102, 4294967288
    %v105 = vperm.slane %v78, %v104
    %vm106 = vcmask 130112
    %v107 = vsel %vm106, %v105, %v103
    %v108 = vadd.s32 %v102, 4294967280
    %v109 = vperm.slane %v79, %v108
    %vm110 = vcmask 195712
    %v111 = vsel %vm110, %v109, %v107
    %v112 = vadd.s32 %v102, 4294967272
    %v113 = vperm.slane %v80, %v112
    %vm114 = vcmask 261312
    %v115 = vsel %vm114, %v113, %v111
    %v116 = vperm.slane %v81, %v102
    %v117 = vperm.slane %v82, %v104
    %v118 = vsel %vm106, %v117, %v116
    %v119 = vperm.slane %v83, %v108
    %v120 = vsel %vm110, %v119, %v118
    %v121 = vperm.slane %v84, %v112
    %v122 = vsel %vm114, %v121, %v120
    %vm123 = vcmask 1041409
    %v124 = vsel %vm123, %v122, %v115
    %vm125 = vcmask 261120
    %v126 = vsel %vm125, %v124, 0
    %128 = vmatpush.msra.mxu0 0.0
    %129 = vmatpush.msra.mxu0 0.0
    %130 = vmatpush.msra.mxu0 0.0
    %131 = vmatpush.msra.mxu0 0.0
    %132 = vmatpush.msra.mxu0 0.0
    %133 = vmatpush.msra.mxu0 0.0
    %134 = vmatpush.msra.mxu0 0.0
    %135 = vmatpush.msra.mxu0 0.0
    %136 = vmatpush.msra.mxu0 0.0
    %137 = vmatpush.msra.mxu0 0.0
    %138 = vmatpush.msra.mxu0 0.0
    %139 = vmatpush.msra.mxu0 0.0
    %140 = vmatpush.msra.mxu0 %v88
    %141 = vmatpush.msra.mxu0 %v87
    %142 = vmatpush.msra.mxu0 %v86
    %143 = vmatpush.msra.mxu0 %v85
    %144 = vmatmul.f32.gmra.mxu0 %v126
    %v145 = vpop.f32.mrf.mxu0
    %v146 = vadd.f32 %v91, %v145
    %147 = vdwg.mxu0
    %vm148 = vcmp.ge.f32.partialorder %v146, 0.0
    %v149 = vmul.f32 %v146, 0.2
    %v150 = vsel %vm148, %v146, %v149
    %v151 = vld [vmem:[%s3] sm:$0xf]
    %v152 = vld [vmem:[%s4] sm:$0x1]
    %v154 = vperm.slane %v152, 0
    %vm156 = vcmask 31744
    %v158 = vsel %vm156, %v150, 0
    %vm160 = vcmask 1043456
    %v162 = vsel %vm160, %v151, 0
    %164 = vmatpush.msra.mxu0 0.0
    %165 = vmatpush.msra.mxu0 0.0
    %166 = vmatpush.msra.mxu0 0.0
    %167 = vmatpush.msra.mxu0 0.0
    %168 = vmatpush.msra.mxu0 0.0
    %169 = vmatpush.msra.mxu0 0.0
    %170 = vmatpush.msra.mxu0 0.0
    %171 = vmatpush.msra.mxu0 0.0
    %172 = vmatpush.msra.mxu0 0.0
    %173 = vmatpush.msra.mxu0 0.0
    %174 = vmatpush.msra.mxu0 0.0
    %175 = vmatpush.msra.mxu0 0.0
    %176 = vmatpush.msra.mxu0 0.0
    %177 = vmatpush.msra.mxu0 0.0
    %178 = vmatpush.msra.mxu0 0.0
    %179 = vmatpush.msra.mxu0 %v162
    %180 = vmatmul.f32.gmra.mxu0 %v158
    %v181 = vpop.f32.mrf.mxu0
    %v182 = vadd.f32 %v154, %v181
    %183 = vdwg.mxu0
    %v184 = vxor.u32 %v182, 2147483648
    %v185 = vmul.f32 %v184, 1.442695
    %v186 = vpow.pop %v185
    %v187 = vadd.f32 %v186, 1.0
    %v188 = vrcp.pop %v187
    %v189 = vmul.f32 %v187, %v188
    %v190 = vsub.f32 1.0, %v189
    %v191 = vmul.f32 %v188, %v190
    %v192 = vadd.f32 %v188, %v191
    %vm193 = vweird.f32 %v187
    %vm194 = vweird.f32 %v188
    %vm195 = vmor %vm193, %vm194
    %v196 = vsel %vm195, %v188, %v192
    %v197 = vand.u32 2147483647, %v187
    %vm198 = vcmp.eq.f32.partialorder %v197, 8.507059e+37
    %v199 = vand.u32 %v187, 2147483648
    %v200 = vor.u32 1.1754944e-38, %v199
    %v201 = vsel %vm198, %v200, %v196
    %v202 = vmul.f32 1.0, %v201
    %v203 = vperm.slane %v202, 0
    %v204 = vlaneseq
    %v205 = vshrl.u32 %v204, 7
    %207 = vset.pattern.permute.xlu0 %v205
    %208 = vperm.xlu0 %207, %v203
    %v209 = vpop.permute.xlu0 %208
    %v210 = vlaneseq
    %v211 = vshrl.u32 %v210, 7
    %v212 = vadd.s32 %v211, 8
    %213 = vset.pattern.permute.xlu0 %v212
    %214 = vperm.xlu0 %213, %v203
    %v215 = vpop.permute.xlu0 %214
    %v216 = vlaneseq
    %v217 = vshrl.u32 %v216, 7
    %v218 = vadd.s32 %v217, 16
    %219 = vset.pattern.permute.xlu0 %v218
    %220 = vperm.xlu0 %219, %v203
    %v221 = vpop.permute.xlu0 %220
    %v222 = vlaneseq
    %v223 = vshrl.u32 %v222, 7
    %v224 = vadd.s32 %v223, 24
    %225 = vset.pattern.permute.xlu0 %v224
    %226 = vperm.xlu0 %225, %v203
    %v227 = vpop.permute.xlu0 %226
    %v228 = vperm.slane %v202, 1
    %v229 = vlaneseq
    %v230 = vshrl.u32 %v229, 7
    %232 = vset.pattern.permute.xlu0 %v230
    %233 = vperm.xlu0 %232, %v228
    %v234 = vpop.permute.xlu0 %233
    %v235 = vlaneseq
    %v236 = vshrl.u32 %v235, 7
    %v237 = vadd.s32 %v236, 8
    %238 = vset.pattern.permute.xlu0 %v237
    %239 = vperm.xlu0 %238, %v228
    %v240 = vpop.permute.xlu0 %239
    %v241 = vlaneseq
    %v242 = vshrl.u32 %v241, 7
    %v243 = vadd.s32 %v242, 16
    %244 = vset.pattern.permute.xlu0 %v243
    %245 = vperm.xlu0 %244, %v228
    %v246 = vpop.permute.xlu0 %245
    %v247 = vlaneseq
    %v248 = vshrl.u32 %v247, 7
    %v249 = vadd.s32 %v248, 24
    %250 = vset.pattern.permute.xlu0 %v249
    %251 = vperm.xlu0 %250, %v228
    %v252 = vpop.permute.xlu0 %251
    %v253 = vmul.f32 %v37, %v209
    %v254 = vmul.f32 %v38, %v209
    %v255 = vmul.f32 %v39, %v215
    %v256 = vmul.f32 %v40, %v215
    %v257 = vmul.f32 %v41, %v221
    %v258 = vmul.f32 %v42, %v221
    %v259 = vmul.f32 %v43, %v227
    %v260 = vmul.f32 %v44, %v227
    %v261 = vmul.f32 %v45, %v234
    %v262 = vmul.f32 %v46, %v234
    %v263 = vmul.f32 %v47, %v240
    %v264 = vmul.f32 %v48, %v240
    %v265 = vmul.f32 %v49, %v246
    %v266 = vmul.f32 %v50, %v246
    %v267 = vmul.f32 %v51, %v252
    %v268 = vmul.f32 %v52, %v252
    %269 = vst [vmem:[#allocation5] sm:$0xff] %v253
    %270 = vst [vmem:[#allocation5 + $0x8] sm:$0xff] %v254
    %271 = vst [vmem:[#allocation5 + $0x10] sm:$0xff] %v255
    %272 = vst [vmem:[#allocation5 + $0x18] sm:$0xff] %v256
    %273 = vst [vmem:[#allocation5 + $0x20] sm:$0xff] %v257
    %274 = vst [vmem:[#allocation5 + $0x28] sm:$0xff] %v258
    %275 = vst [vmem:[#allocation5 + $0x30] sm:$0xff] %v259
    %276 = vst [vmem:[#allocation5 + $0x38] sm:$0xff] %v260
    %277 = vst [vmem:[#allocation5 + $0x40] sm:$0xff] %v261
    %278 = vst [vmem:[#allocation5 + $0x48] sm:$0xff] %v262
    %279 = vst [vmem:[#allocation5 + $0x50] sm:$0xff] %v263
    %280 = vst [vmem:[#allocation5 + $0x58] sm:$0xff] %v264
    %281 = vst [vmem:[#allocation5 + $0x60] sm:$0xff] %v265
    %282 = vst [vmem:[#allocation5 + $0x68] sm:$0xff] %v266
    %283 = vst [vmem:[#allocation5 + $0x70] sm:$0xff] %v267
    %284 = vst [vmem:[#allocation5 + $0x78] sm:$0xff] %v268
    // Predicated region
    $region26: #{tpu_custom_call.1} parent=1 // pred_check
      _
    $region27: #{tpu_custom_call.1} parent=1 // pred_check_branch
      %286 = sbr.rel (0) target = $region29
    $region28: #{tpu_custom_call.1} parent=1 // pred_region
      %288 = vsyncadd [#allocation4], 0
      %s289 = sshll.u32 [#allocation5], 4
      %s290 = int_to_ptr.vmem [resolvable:$true] %s289
      %s291 = sshll.u32 %s5, 4
      %s292 = int_to_ptr.hbm [resolvable:$true] %s291
      %297 = dma.vmem_to_hbm [thread:$0]  %s290, 2048, %s292, [#allocation4], 256, 256, 16
    $region29: #{tpu_custom_call.1} parent=1 // pred_fallthru
      _
    // Predicated region
    $region30: #{tpu_custom_call.1} parent=1 // pred_check
      _
    $region31: #{tpu_custom_call.1} parent=1 // pred_check_branch
      %299 = sbr.rel (0) target = $region33
    $region32: #{tpu_custom_call.1} parent=1 // pred_region
      %301 = dma.done [#allocation4], 2048
    $region33: #{tpu_custom_call.1} parent=1 // pred_fallthru
      _
    %302 = vsyncpa [#allocation3], 1
    %303 = vsyncpa [#allocation4], 1

</llo_original>
